<compile_context>
chip_gen: v5e
topology: v5e:2x2
jax: 0.10.0
libtpu: 0.0.40
codegen_flags: <defaults>
</compile_context>

<pallas_src>
import jax
import jax.numpy as jnp
from jax import lax
from jax.experimental import pallas as pl
from jax.experimental.pallas import tpu as pltpu


# ----------------------------------------------------------------------------
# Activation power (static k)
# ----------------------------------------------------------------------------
def _make_pow_fn(k):
    """Static power applied after ReLU (input is always >= 0)."""
    kf = float(k)
    if kf == 1.0:
        return lambda h: h
    if kf.is_integer() and kf >= 0.0:
        ki = int(kf)
        if ki == 0:
            # Matches PyTorch: relu(x) ** 0 == 1 everywhere (0 ** 0 == 1).
            return lambda h: jnp.ones_like(h)

        def _ipow(h):
            # Exponentiation by squaring: O(log k) VALU multiplies.
            result = None
            base = h
            e = ki
            while e > 0:
                if e & 1:
                    result = base if result is None else result * base
                e >>= 1
                if e:
                    base = base * base
            return result

        return _ipow
    # Fractional exponent: safe because the base is non-negative after ReLU.
    return lambda h: h ** kf


# ----------------------------------------------------------------------------
# Kernels
# ----------------------------------------------------------------------------
def _make_vpu_kernel(k, d_in):
    """Small D_in, C == 1: pure VPU/XLU, batch on the lane axis."""
    pow_fn = _make_pow_fn(k)

    def kernel(xt_ref, wp_ref, o_ref):
        # xt_ref: (D_in, TB)   -- batch on lanes
        # wp_ref: (H, D_in+2)  -- col 0 = bias, cols 1..D_in = fc1.weight,
        #                         col D_in+1 = fc2.weight^T
        # o_ref : (1, TB)      -- lane-dense output row
        xt = xt_ref[...]
        h = wp_ref[:, 0:1]                                   # (H, 1) bias
        for j in range(d_in):                                # static unroll
            # (H,1) weight column * (1,TB) stride-0 sublane-broadcast x row
            h = h + wp_ref[:, j + 1:j + 2] * xt[j:j + 1, :]  # -> (H, TB)
        h = pow_fn(jnp.maximum(h, 0.0))
        # fc2 (single class): multiply by w2 column, reduce over sublane (H).
        o_ref[...] = jnp.sum(wp_ref[:, d_in + 1:d_in + 2] * h,
                             axis=0, keepdims=True).astype(o_ref.dtype)

    return kernel


def _make_hybrid_kernel(k):
    """Wide D_in, C == 1: MXU for fc1 (transposed layout), VPU reduce for fc2."""
    pow_fn = _make_pow_fn(k)

    def kernel(xt_ref, w1_ref, b1_ref, w2t_ref, o_ref):
        # xt_ref:  (D_in, TB), w1_ref: (H, D_in) (PyTorch layout, contracts on
        # its minor dim against xt's major dim -> no in-kernel relayout),
        # b1_ref: (H, 1), w2t_ref: (H, 1), o_ref: (1, TB)
        h = lax.dot_general(w1_ref[...], xt_ref[...],
                            dimension_numbers=(((1,), (0,)), ((), ())),
                            preferred_element_type=jnp.float32) + b1_ref[...]
        h = pow_fn(jnp.maximum(h, 0.0))
        o_ref[...] = jnp.sum(w2t_ref[...] * h, axis=0,
                             keepdims=True).astype(o_ref.dtype)

    return kernel


def _make_mxu_kernel(k):
    """General fallback (C > 1): two MXU matmuls; weights pre-transposed once
    in the wrapper so no per-step in-kernel transpose is needed."""
    pow_fn = _make_pow_fn(k)

    def kernel(x_ref, w1t_ref, b1_ref, w2t_ref, o_ref):
        # x_ref: (TB, D_in), w1t_ref: (D_in, H), b1_ref: (1, H), w2t_ref: (H, C)
        h = lax.dot_general(x_ref[...], w1t_ref[...],
                            dimension_numbers=(((1,), (0,)), ((), ())),
                            preferred_element_type=jnp.float32) + b1_ref[...]
        h = pow_fn(jnp.maximum(h, 0.0))
        o_ref[...] = lax.dot_general(h, w2t_ref[...],
                                     dimension_numbers=(((1,), (0,)), ((), ())),
                                     preferred_element_type=jnp.float32
                                     ).astype(o_ref.dtype)

    return kernel


# ----------------------------------------------------------------------------
# Wrapper
# ----------------------------------------------------------------------------
_SMALL_BATCH_MAX = 512    # below this: single invocation, no grid / pipeline
_BATCH_TILE = 4096        # max batch-tile (lanes) for the gridded path


def _pick_tile(B):
    """Batch tile: big enough to amortize grid-step overhead, small enough to
    guarantee >= 2 grid steps (so v7x can shard the parallel axis over 2 TCs),
    and a multiple of 128 lanes."""
    tb = min(_BATCH_TILE, pl.cdiv(B, 2))
    tb = max(128, ((tb + 127) // 128) * 128)
    return tb


def relu_k_mlp(x, w1, b1, w2, k=1):
    """Pallas implementation of `model.forward`.

    Args:
      x:  (B, input_size) float32
      w1: (hidden_size1, input_size) float32   -- PyTorch fc1.weight layout
      b1: (hidden_size1,) float32              -- fc1.bias
      w2: (num_classes, hidden_size1) float32  -- fc2.weight (no bias)
      k:  static power applied after ReLU (int or float)
    Returns:
      (B, num_classes) float32
    """
    B, D_in = x.shape
    H, _ = w1.shape
    C, _ = w2.shape

    lane_dense = (C == 1)
    if lane_dense:
        # Batch-on-lanes layout: one wrapper-side transpose of x, lane-dense
        # (1, B) output inside the kernel.
        xt = jnp.transpose(x)                                  # (D_in, B)
        if D_in <= 8:
            # Single packed weight operand: (H, D_in + 2)
            wp = jnp.concatenate([b1[:, None], w1, jnp.transpose(w2)], axis=1)
            kernel = _make_vpu_kernel(k, D_in)
            inputs = (xt, wp)
            weight_shapes = (wp.shape,)
        else:
            kernel = _make_hybrid_kernel(k)
            inputs = (xt, w1, b1[:, None], jnp.transpose(w2))
            weight_shapes = (w1.shape, (H, 1), (H, 1))
        out_shape = jax.ShapeDtypeStruct((1, B), jnp.float32)
    else:
        kernel = _make_mxu_kernel(k)
        inputs = (x, jnp.transpose(w1), b1[None, :], jnp.transpose(w2))
        weight_shapes = ((D_in, H), (1, H), (H, C))
        out_shape = jax.ShapeDtypeStruct((B, C), jnp.float32)

    if B <= _SMALL_BATCH_MAX:
        # No grid: the whole problem fits in VMEM; a 1-step pipeline would only
        # add prologue/epilogue overhead at this size.
        vmem = pl.BlockSpec(memory_space=pltpu.MemorySpace.VMEM)
        out = pl.pallas_call(
            kernel,
            out_shape=out_shape,
            in_specs=[vmem] * len(inputs),
            out_specs=vmem,
        )(*inputs)
    else:
        tb = _pick_tile(B)
        grid = (pl.cdiv(B, tb),)
        if lane_dense:
            in_specs = [pl.BlockSpec((D_in, tb), lambda i: (0, i))]
            out_specs = pl.BlockSpec((1, tb), lambda i: (0, i))
        else:
            in_specs = [pl.BlockSpec((tb, D_in), lambda i: (i, 0))]
            out_specs = pl.BlockSpec((tb, C), lambda i: (i, 0))
        # Weights: constant index maps -> VMEM-resident across grid steps.
        for ws in weight_shapes:
            in_specs.append(pl.BlockSpec(ws, lambda i: (0, 0)))
        out = pl.pallas_call(
            kernel,
            out_shape=out_shape,
            grid=grid,
            in_specs=in_specs,
            out_specs=out_specs,
            compiler_params=pltpu.CompilerParams(
                dimension_semantics=("parallel",)),
        )(*inputs)

    if lane_dense:
        # (1, B) lane-dense kernel output -> (B, 1); same row-major data.
        out = out.reshape(B, 1)
    return out


# ----------------------------------------------------------------------------
# Pure-JAX reference matching the PyTorch forward
# ----------------------------------------------------------------------------
def _reference(x, w1, b1, w2, k):
    h = jnp.maximum(x @ w1.T + b1, 0.0) ** k
    return h @ w2.T


if __name__ == "__main__":
    # Shapes consistent with the module: 3-D input (OGA 3D), modest hidden
    # width, scalar output, ReLU^2 activation.
    input_size = 3
    hidden_size1 = 32
    num_classes = 1
    k = 2

    key = jax.random.PRNGKey(0)
    kx, kw1, kb1, kw2, kx2 = jax.random.split(key, 5)

    w1 = 0.5 * jax.random.normal(kw1, (hidden_size1, input_size), dtype=jnp.float32)
    b1 = 0.1 * jax.random.normal(kb1, (hidden_size1,), dtype=jnp.float32)
    w2 = 0.5 * jax.random.normal(kw2, (num_classes, hidden_size1), dtype=jnp.float32)

    # Small batch: no-grid VPU path.
    batch = 8
    x = jax.random.normal(kx, (batch, input_size), dtype=jnp.float32)
    out = jax.block_until_ready(relu_k_mlp(x, w1, b1, w2, k=k))
    ref = _reference(x, w1, b1, w2, k)
    assert out.shape == (batch, num_classes)
    assert jnp.allclose(out, ref, atol=1e-5, rtol=1e-5), (out, ref)

    # Larger batch: exercises the gridded, lane-dense path (ragged last tile).
    batch2 = 640
    x2 = jax.random.normal(kx2, (batch2, input_size), dtype=jnp.float32)
    out2 = jax.block_until_ready(relu_k_mlp(x2, w1, b1, w2, k=k))
    ref2 = _reference(x2, w1, b1, w2, k)
    assert out2.shape == (batch2, num_classes)
    assert jnp.allclose(out2, ref2, atol=1e-5, rtol=1e-5)

    print("KERNEL_OK")
</pallas_src>

<mosaic_0001>
module attributes {stable_mosaic.version = 11 : i64} {
  func.func @kernel(%arg0: memref<3x8xf32, #tpu.memory_space<vmem>>, %arg1: memref<32x5xf32, #tpu.memory_space<vmem>>, %arg2: memref<1x8xf32, #tpu.memory_space<vmem>>) attributes {dimension_semantics = [], scalar_prefetch = 0 : i64, scratch_operands = 0 : i64, tpu.core_type = #tpu.core_type<tc>} {
    %c0 = arith.constant 0 : index
    %c0_0 = arith.constant 0 : index
    %0 = vector.load %arg0[%c0, %c0_0] : memref<3x8xf32, #tpu.memory_space<vmem>>, vector<3x8xf32>
    %c0_1 = arith.constant 0 : index
    %c0_2 = arith.constant 0 : index
    %1 = vector.load %arg1[%c0_1, %c0_2] : memref<32x5xf32, #tpu.memory_space<vmem>>, vector<32x1xf32>
    %c0_3 = arith.constant 0 : index
    %c1 = arith.constant 1 : index
    %2 = vector.load %arg1[%c0_3, %c1] : memref<32x5xf32, #tpu.memory_space<vmem>>, vector<32x1xf32>
    %3 = vector.extract_strided_slice %0 {offsets = [0, 0], sizes = [1, 8], strides = [1, 1]} : vector<3x8xf32> to vector<1x8xf32>
    %4 = vector.broadcast %2 : vector<32x1xf32> to vector<32x8xf32>
    %5 = vector.broadcast %3 : vector<1x8xf32> to vector<32x8xf32>
    %6 = arith.mulf %4, %5 : vector<32x8xf32>
    %7 = vector.broadcast %1 : vector<32x1xf32> to vector<32x8xf32>
    %8 = arith.addf %7, %6 : vector<32x8xf32>
    %c0_4 = arith.constant 0 : index
    %c2 = arith.constant 2 : index
    %9 = vector.load %arg1[%c0_4, %c2] : memref<32x5xf32, #tpu.memory_space<vmem>>, vector<32x1xf32>
    %10 = vector.extract_strided_slice %0 {offsets = [1, 0], sizes = [1, 8], strides = [1, 1]} : vector<3x8xf32> to vector<1x8xf32>
    %11 = vector.broadcast %9 : vector<32x1xf32> to vector<32x8xf32>
    %12 = vector.broadcast %10 : vector<1x8xf32> to vector<32x8xf32>
    %13 = arith.mulf %11, %12 : vector<32x8xf32>
    %14 = arith.addf %8, %13 : vector<32x8xf32>
    %c0_5 = arith.constant 0 : index
    %c3 = arith.constant 3 : index
    %15 = vector.load %arg1[%c0_5, %c3] : memref<32x5xf32, #tpu.memory_space<vmem>>, vector<32x1xf32>
    %16 = vector.extract_strided_slice %0 {offsets = [2, 0], sizes = [1, 8], strides = [1, 1]} : vector<3x8xf32> to vector<1x8xf32>
    %17 = vector.broadcast %15 : vector<32x1xf32> to vector<32x8xf32>
    %18 = vector.broadcast %16 : vector<1x8xf32> to vector<32x8xf32>
    %19 = arith.mulf %17, %18 : vector<32x8xf32>
    %20 = arith.addf %14, %19 : vector<32x8xf32>
    %cst = arith.constant 0.000000e+00 : f32
    %21 = vector.broadcast %cst : f32 to vector<32x8xf32>
    %22 = arith.maximumf %20, %21 : vector<32x8xf32>
    %23 = arith.mulf %22, %22 : vector<32x8xf32>
    %c0_6 = arith.constant 0 : index
    %c4 = arith.constant 4 : index
    %24 = vector.load %arg1[%c0_6, %c4] : memref<32x5xf32, #tpu.memory_space<vmem>>, vector<32x1xf32>
    %25 = vector.broadcast %24 : vector<32x1xf32> to vector<32x8xf32>
    %26 = arith.mulf %25, %23 : vector<32x8xf32>
    %cst_7 = arith.constant dense<0.000000e+00> : vector<8xf32>
    %27 = vector.multi_reduction <add>, %26, %cst_7 [0] : vector<32x8xf32> to vector<8xf32>
    %28 = vector.shape_cast %27 : vector<8xf32> to vector<1x8xf32>
    %c0_8 = arith.constant 0 : index
    %c0_9 = arith.constant 0 : index
    %29 = vector.load %arg2[%c0_8, %c0_9] : memref<1x8xf32, #tpu.memory_space<vmem>>, vector<1x8xf32>
    tpu.vector_store %arg2[%c0_8, %c0_9], %28 {strides = array<i32>} : memref<1x8xf32, #tpu.memory_space<vmem>>, vector<1x8xf32>,
    return
  }
}

</mosaic_0001>

<llo_original>
// kernel: tpu_custom_call.1
$region0: #{tpu_custom_call.1}
  #allocation0 [shape = 'u32[]', space=smem, size = 0x4, offset = 0x4, fixed_abs, tag = 'smem constant byte address 0x4 - core index']
  #allocation1 [shape = 'u32[72,128]{1,0:T(1,128)}', space=vmem, size = 0x9000, scoped, tag = 'internal scratch']
  %s0 = inlined_call_operand.vmem [shape: f32[3,8], index: 0, kind: input, shape index: {}]
  %s1 = inlined_call_operand.vmem [shape: f32[32,5], index: 1, kind: input, shape index: {}]
  %s2 = inlined_call_operand.hbm [shape: f32[1,8], index: 2, kind: output, shape index: {}]
  %s3 = sld [smem:[#allocation0]]
  $region18: #{tpu_custom_call.1} parent=0
    _
  %s5 = ssub.s32 1, %s3
  %s6 = scalar_select 0, %s5, %s3
  $region1: #{tpu_custom_call.1} parent=0
    #allocation2 [shape = 'u8[512]{0}', space=vmem, size = 0x400, scoped, tag = 'output window, operand 0, single buffered']
    #allocation3 [shape = 's32[1]{0}', space=sflag, size = 0x4, scoped, tag = 'scoped memory for tpu_custom_call.1']
    %7 = vsyncpa [#allocation3], 0
    // Predicated region
    $region2: #{tpu_custom_call.1} parent=1 // pred_check
      _
    $region3: #{tpu_custom_call.1} parent=1 // pred_check_branch
      %9 = sbr.rel (0) target = $region5
    $region4: #{tpu_custom_call.1} parent=1 // pred_region
      _
    $region5: #{tpu_custom_call.1} parent=1 // pred_fallthru
      _
    // Predicated region
    $region6: #{tpu_custom_call.1} parent=1 // pred_check
      _
    $region7: #{tpu_custom_call.1} parent=1 // pred_check_branch
      %11 = sbr.rel (0) target = $region9
    $region8: #{tpu_custom_call.1} parent=1 // pred_region
      _
    $region9: #{tpu_custom_call.1} parent=1 // pred_fallthru
      _
    %v12 = vld [vmem:[%s0] sm:$0x7]
    %v13 = vld [vmem:[%s1] sm:$0xff]
    %v14 = vld [vmem:[%s1 + $0x8] sm:$0xff]
    %v15 = vld [vmem:[%s1 + $0x10] sm:$0xff]
    %v16 = vld [vmem:[%s1 + $0x18] sm:$0xff]
    %18 = vset.pattern.permute.xlu0 1
    %19 = vperm.xlu0 %18, %v13
    %v20 = vpop.permute.xlu0 %19
    %23 = vset.pattern.permute.xlu0 1
    %24 = vperm.xlu0 %23, %v14
    %v25 = vpop.permute.xlu0 %24
    %28 = vset.pattern.permute.xlu0 1
    %29 = vperm.xlu0 %28, %v15
    %v30 = vpop.permute.xlu0 %29
    %33 = vset.pattern.permute.xlu0 1
    %34 = vperm.xlu0 %33, %v16
    %v35 = vpop.permute.xlu0 %34
    %v37 = vperm.slane %v12, 0
    %v38 = vmul.f32 %v20, %v37
    %v39 = vmul.f32 %v25, %v37
    %v40 = vmul.f32 %v30, %v37
    %v41 = vmul.f32 %v35, %v37
    %42 = vset.pattern.permute.xlu0 0
    %43 = vperm.xlu0 %42, %v13
    %v44 = vpop.permute.xlu0 %43
    %46 = vset.pattern.permute.xlu0 0
    %47 = vperm.xlu0 %46, %v14
    %v48 = vpop.permute.xlu0 %47
    %50 = vset.pattern.permute.xlu0 0
    %51 = vperm.xlu0 %50, %v15
    %v52 = vpop.permute.xlu0 %51
    %54 = vset.pattern.permute.xlu0 0
    %55 = vperm.xlu0 %54, %v16
    %v56 = vpop.permute.xlu0 %55
    %v58 = vadd.f32 %v44, %v38
    %v59 = vadd.f32 %v48, %v39
    %v60 = vadd.f32 %v52, %v40
    %v61 = vadd.f32 %v56, %v41
    %62 = vset.pattern.permute.xlu0 2
    %63 = vperm.xlu0 %62, %v13
    %v64 = vpop.permute.xlu0 %63
    %66 = vset.pattern.permute.xlu0 2
    %67 = vperm.xlu0 %66, %v14
    %v68 = vpop.permute.xlu0 %67
    %70 = vset.pattern.permute.xlu0 2
    %71 = vperm.xlu0 %70, %v15
    %v72 = vpop.permute.xlu0 %71
    %74 = vset.pattern.permute.xlu0 2
    %75 = vperm.xlu0 %74, %v16
    %v76 = vpop.permute.xlu0 %75
    %v78 = vperm.slane %v12, 1
    %v79 = vmul.f32 %v64, %v78
    %v80 = vmul.f32 %v68, %v78
    %v81 = vmul.f32 %v72, %v78
    %v82 = vmul.f32 %v76, %v78
    %v83 = vadd.f32 %v58, %v79
    %v84 = vadd.f32 %v59, %v80
    %v85 = vadd.f32 %v60, %v81
    %v86 = vadd.f32 %v61, %v82
    %87 = vset.pattern.permute.xlu0 3
    %88 = vperm.xlu0 %87, %v13
    %v89 = vpop.permute.xlu0 %88
    %91 = vset.pattern.permute.xlu0 3
    %92 = vperm.xlu0 %91, %v14
    %v93 = vpop.permute.xlu0 %92
    %95 = vset.pattern.permute.xlu0 3
    %96 = vperm.xlu0 %95, %v15
    %v97 = vpop.permute.xlu0 %96
    %99 = vset.pattern.permute.xlu0 3
    %100 = vperm.xlu0 %99, %v16
    %v101 = vpop.permute.xlu0 %100
    %v103 = vperm.slane %v12, 2
    %v104 = vmul.f32 %v89, %v103
    %v105 = vmul.f32 %v93, %v103
    %v106 = vmul.f32 %v97, %v103
    %v107 = vmul.f32 %v101, %v103
    %v108 = vadd.f32 %v83, %v104
    %v109 = vadd.f32 %v84, %v105
    %v110 = vadd.f32 %v85, %v106
    %v111 = vadd.f32 %v86, %v107
    %v112 = vmax.f32 %v108, 0.0
    %v113 = vmax.f32 %v109, 0.0
    %v114 = vmax.f32 %v110, 0.0
    %v115 = vmax.f32 %v111, 0.0
    %v116 = vmul.f32 %v112, %v112
    %v117 = vmul.f32 %v113, %v113
    %v118 = vmul.f32 %v114, %v114
    %v119 = vmul.f32 %v115, %v115
    %120 = vset.pattern.permute.xlu0 4
    %121 = vperm.xlu0 %120, %v13
    %v122 = vpop.permute.xlu0 %121
    %124 = vset.pattern.permute.xlu0 4
    %125 = vperm.xlu0 %124, %v14
    %v126 = vpop.permute.xlu0 %125
    %128 = vset.pattern.permute.xlu0 4
    %129 = vperm.xlu0 %128, %v15
    %v130 = vpop.permute.xlu0 %129
    %132 = vset.pattern.permute.xlu0 4
    %133 = vperm.xlu0 %132, %v16
    %v134 = vpop.permute.xlu0 %133
    %v136 = vmul.f32 %v122, %v116
    %v137 = vmul.f32 %v126, %v117
    %v138 = vmul.f32 %v130, %v118
    %v139 = vmul.f32 %v134, %v119
    %vm140 = vcmask 64512
    %v141 = vsel %vm140, %v136, 0.0
    %v142 = vsel %vm140, %v137, 0.0
    %v143 = vadd.f32 %v141, %v142
    %v144 = vsel %vm140, %v138, 0.0
    %v145 = vadd.f32 %v143, %v144
    %v146 = vsel %vm140, %v139, 0.0
    %v147 = vadd.f32 %v145, %v146
    %v148 = vrot.slane %v147, 4
    %v149 = vadd.f32 %v147, %v148
    %v150 = vrot.slane %v149, 2
    %v151 = vadd.f32 %v149, %v150
    %v152 = vrot.slane %v151, 1
    %v153 = vadd.f32 %v151, %v152
    %vm154 = vcmask 57344
    %155 = vst.msk [vmem:[#allocation2] sm:$0x1] %vm154, %v153
    // Predicated region
    $region10: #{tpu_custom_call.1} parent=1 // pred_check
      _
    $region11: #{tpu_custom_call.1} parent=1 // pred_check_branch
      %157 = sbr.rel (0) target = $region13
    $region12: #{tpu_custom_call.1} parent=1 // pred_region
      %159 = vsyncadd [#allocation3], 0
      %s161 = sshll.u32 [#allocation2], 4
      %s162 = int_to_ptr.vmem [resolvable:$true] %s161
      %s163 = sshll.u32 %s2, 4
      %s164 = int_to_ptr.hbm [resolvable:$true] %s163
      %166 = dma.vmem_to_hbm [thread:$0]  %s162, 16, %s164, [#allocation3]
    $region13: #{tpu_custom_call.1} parent=1 // pred_fallthru
      _
    // Predicated region
    $region14: #{tpu_custom_call.1} parent=1 // pred_check
      _
    $region15: #{tpu_custom_call.1} parent=1 // pred_check_branch
      %168 = sbr.rel (0) target = $region17
    $region16: #{tpu_custom_call.1} parent=1 // pred_region
      %170 = dma.done [#allocation3], 16
    $region17: #{tpu_custom_call.1} parent=1 // pred_fallthru
      _
    %171 = vsyncpa [#allocation3], 1

</llo_original>
